<compile_context>
chip_gen: v5e
topology: v5e:2x2
jax: 0.10.0
libtpu: 0.0.40
codegen_flags: <defaults>
</compile_context>

<pallas_src>
import functools

import jax
import jax.numpy as jnp
from jax.experimental import pallas as pl
from jax.experimental.pallas import tpu as pltpu


def _round_up(x, m):
    return (x + m - 1) // m * m


def _vmem_budget_bytes():
    """~75% of this generation's VMEM; safe fallback works on every generation (incl. v7x)."""
    try:
        cap = pltpu.get_tpu_info().vmem_capacity_bytes
        return int(cap * 0.75)
    except Exception:
        return 48 * 1024 * 1024  # conservative: 75% of v7x's 64 MiB


def _auto_tiles(M, D_in, D_out, x_itemsize, w_itemsize, o_itemsize, c_itemsize, budget):
    """Pick (tile_m, tile_n): lane-dense tile_n (multiple of 128), tile_m as large as the
    VMEM budget allows (fewer row tiles -> fewer weight re-streams from HBM)."""
    m_cap = min(1024, _round_up(M, 8))
    n_full = _round_up(D_out, 128)

    def fits(tm, tn):
        fixed = (2 * D_in * tn * w_itemsize      # weight tile, double-buffered
                 + 2 * tn * 4                    # bias tile, double-buffered
                 + 2 * 2 * D_in * 4)             # gamma/beta
        per_row = (2 * D_in * x_itemsize         # x tile, double-buffered
                   + 2 * tn * o_itemsize         # out tile, double-buffered
                   + D_in * c_itemsize           # xn scratch (single-buffered)
                   + 3 * D_in * 4)               # f32 LN temporaries (headroom)
        return fixed + tm * per_row <= budget

    for tn in (min(256, n_full), 128):
        for tm_cand in (1024, 512, 256, 128, 64, 32, 16, 8):
            tm = min(tm_cand, m_cap)
            if fits(tm, tn):
                return tm, tn
    # TODO(synk): K-tiled (D_in-tiled) fallback with a two-pass LN is not implemented; for
    # extremely large D_in this minimal tiling may spill.
    return 8, 128


def _linear_layer_kernel(x_ref, gamma_ref, beta_ref, w_ref, b_ref, o_ref, xn_ref, *, eps):
    # x_ref:     (TM, D_in)   row tile (same block re-used for every j: no re-DMA)
    # gamma_ref: (1, D_in)    LayerNorm scale
    # beta_ref:  (1, D_in)    LayerNorm shift
    # w_ref:     (D_in, TN)   pre-transposed weight column tile
    # b_ref:     (1, TN)      bias tile
    # o_ref:     (TM, TN)     output tile (lane-dense; ragged edges masked by Pallas)
    # xn_ref:    (TM, D_in)   VMEM scratch: normalized rows, cached across the j axis

    @pl.when(pl.program_id(1) == 0)
    def _():
        # LayerNorm once per row tile, single-pass statistics in f32.
        x = x_ref[...].astype(jnp.float32)
        mean = jnp.mean(x, axis=-1, keepdims=True)
        mean_sq = jnp.mean(x * x, axis=-1, keepdims=True)
        var = jnp.maximum(mean_sq - mean * mean, 0.0)
        xn = (x - mean) * jax.lax.rsqrt(var + eps)
        xn = xn * gamma_ref[...].astype(jnp.float32) + beta_ref[...].astype(jnp.float32)
        xn_ref[...] = xn.astype(xn_ref.dtype)

    # Dropout is identity in eval mode (deterministic forward).
    # TODO(synk): training-mode dropout (stochastic masking via pltpu.prng_*) not implemented.

    # MXU matmul: (TM, K) @ (K, TN), f32 accumulation.
    y = jnp.dot(xn_ref[...], w_ref[...], preferred_element_type=jnp.float32)
    y = y + b_ref[...].astype(jnp.float32)
    y = jnp.maximum(y, 0.0)
    o_ref[...] = y.astype(o_ref.dtype)


def linear_layer_pallas(x, gamma, beta, weight, bias, *, eps=1e-5,
                        matmul_dtype=None, tile_m=None, tile_n=None):
    """x: (N, L, D_in) -> (N, L, D_out).
    weight: (D_out, D_in) (PyTorch nn.Linear layout), bias: (D_out,)."""
    N, L, D_in = x.shape
    D_out, D_in_w = weight.shape
    assert D_in_w == D_in, "weight shape must be (D_out, D_in)"
    M = N * L

    compute_dtype = jnp.dtype(matmul_dtype) if matmul_dtype is not None else jnp.dtype(weight.dtype)

    budget = _vmem_budget_bytes()
    auto_tm, auto_tn = _auto_tiles(
        M, D_in, D_out,
        jnp.dtype(x.dtype).itemsize, jnp.dtype(compute_dtype).itemsize,
        jnp.dtype(x.dtype).itemsize, jnp.dtype(compute_dtype).itemsize, budget)
    if tile_m is None:
        tile_m = auto_tm
    if tile_n is None:
        tile_n = auto_tn

    x2d = x.reshape(M, D_in)                      # no padding: ragged tiles handled by Pallas
    g2d = gamma.reshape(1, D_in)
    beta2d = beta.reshape(1, D_in)
    b2d = bias.reshape(1, D_out)

    # One-time, parameter-only transpose (and optional cast) outside the kernel so the inner
    # matmul is a plain NN-form (tile_m, K) x (K, tile_n) with no per-tile transposes.
    w_t = weight.T
    if w_t.dtype != compute_dtype:
        w_t = w_t.astype(compute_dtype)

    grid = (pl.cdiv(M, tile_m), pl.cdiv(D_out, tile_n))
    kernel = functools.partial(_linear_layer_kernel, eps=eps)

    x_it = jnp.dtype(x.dtype).itemsize
    cost = pl.CostEstimate(
        flops=2 * M * D_in * D_out,
        transcendentals=M,  # one rsqrt per row
        bytes_accessed=(M * D_in * x_it
                        + D_in * D_out * jnp.dtype(w_t.dtype).itemsize
                        + 2 * D_in * jnp.dtype(gamma.dtype).itemsize
                        + D_out * jnp.dtype(bias.dtype).itemsize
                        + M * D_out * x_it))

    out2d = pl.pallas_call(
        kernel,
        out_shape=jax.ShapeDtypeStruct((M, D_out), x.dtype),
        grid_spec=pltpu.PrefetchScalarGridSpec(
            num_scalar_prefetch=0,
            grid=grid,
            in_specs=[
                pl.BlockSpec((tile_m, D_in), lambda i, j: (i, 0)),   # x rows (invariant in j)
                pl.BlockSpec((1, D_in), lambda i, j: (0, 0)),        # gamma
                pl.BlockSpec((1, D_in), lambda i, j: (0, 0)),        # beta
                pl.BlockSpec((D_in, tile_n), lambda i, j: (0, j)),   # weight^T column tile
                pl.BlockSpec((1, tile_n), lambda i, j: (0, j)),      # bias tile
            ],
            out_specs=pl.BlockSpec((tile_m, tile_n), lambda i, j: (i, j)),
            scratch_shapes=[pltpu.VMEM((tile_m, D_in), compute_dtype)],   # cached LN rows
        ),
        compiler_params=pltpu.CompilerParams(
            # j carries the LN cache -> must be "arbitrary"; i stays "parallel" so v7x
            # megacore still shards the row axis.
            dimension_semantics=("parallel", "arbitrary"),
            vmem_limit_bytes=budget,
        ),
        cost_estimate=cost,
    )(x2d, g2d, beta2d, w_t, b2d)

    return out2d.reshape(N, L, D_out)


def linear_layer_ref(x, gamma, beta, weight, bias, eps=1e-5):
    """Pure-JAX reference matching the PyTorch forward (eval mode)."""
    mean = jnp.mean(x, axis=-1, keepdims=True)
    var = jnp.mean((x - mean) ** 2, axis=-1, keepdims=True)
    xn = (x - mean) / jnp.sqrt(var + eps)
    xn = xn * gamma + beta
    y = xn @ weight.T + bias
    return jnp.maximum(y, 0.0)


if __name__ == "__main__":
    key = jax.random.PRNGKey(0)
    N, L, in_hsz, out_hsz = 2, 8, 32, 32

    k_x, k_w, k_b = jax.random.split(key, 3)
    x = jax.random.normal(k_x, (N, L, in_hsz), dtype=jnp.float32)

    # Deterministic parameter init (shapes from the module's __init__).
    gamma = jnp.ones((in_hsz,), dtype=jnp.float32)                                # LayerNorm weight
    beta = jnp.zeros((in_hsz,), dtype=jnp.float32)                                # LayerNorm bias
    weight = jax.random.normal(k_w, (out_hsz, in_hsz), dtype=jnp.float32) * 0.1   # nn.Linear.weight
    bias = jax.random.normal(k_b, (out_hsz,), dtype=jnp.float32) * 0.1            # nn.Linear.bias

    out = linear_layer_pallas(x, gamma, beta, weight, bias)
    out = jax.block_until_ready(out)

    ref = linear_layer_ref(x, gamma, beta, weight, bias)
    assert out.shape == (N, L, out_hsz)
    assert jnp.allclose(out, ref, atol=1e-4, rtol=1e-4), "mismatch vs reference"

    print("KERNEL_OK")
</pallas_src>

<mosaic_0001>
module attributes {stable_mosaic.version = 11 : i64} {
  func.func @_linear_layer_kernel(%arg0: i32, %arg1: i32, %arg2: memref<16x32xf32, #tpu.memory_space<vmem>>, %arg3: memref<1x32xf32, #tpu.memory_space<vmem>>, %arg4: memref<1x32xf32, #tpu.memory_space<vmem>>, %arg5: memref<32x128xf32, #tpu.memory_space<vmem>>, %arg6: memref<1x128xf32, #tpu.memory_space<vmem>>, %arg7: memref<16x128xf32, #tpu.memory_space<vmem>>, %arg8: memref<16x32xf32, #tpu.memory_space<vmem>>) attributes {dimension_semantics = [#tpu.dimension_semantics<parallel>, #tpu.dimension_semantics<arbitrary>], iteration_bounds = array<i64: 1, 1>, scalar_prefetch = 0 : i64, scratch_operands = 1 : i64, tpu.core_type = #tpu.core_type<tc>, window_params = [{transform_indices = @transform_0, window_bounds = array<i64: 16, 32>}, {pipeline_mode = #tpu.pipeline_mode<synchronous>, transform_indices = @transform_1, window_bounds = array<i64: 1, 32>}, {pipeline_mode = #tpu.pipeline_mode<synchronous>, transform_indices = @transform_2, window_bounds = array<i64: 1, 32>}, {transform_indices = @transform_3, window_bounds = array<i64: 32, 128>}, {transform_indices = @transform_4, window_bounds = array<i64: 1, 128>}, {transform_indices = @transform_5, window_bounds = array<i64: 16, 128>}]} {
    %c0_i32 = arith.constant 0 : i32
    %0 = arith.cmpi eq, %arg1, %c0_i32 : i32
    %1 = arith.extui %0 : i1 to i32
    %c0_i32_0 = arith.constant 0 : i32
    %2 = arith.cmpi ne, %1, %c0_i32_0 : i32
    scf.if %2 {
      %c0_9 = arith.constant 0 : index
      %c0_10 = arith.constant 0 : index
      %12 = vector.load %arg2[%c0_9, %c0_10] : memref<16x32xf32, #tpu.memory_space<vmem>>, vector<16x32xf32>
      %cst_11 = arith.constant dense<0.000000e+00> : vector<16xf32>
      %13 = vector.multi_reduction <add>, %12, %cst_11 [1] : vector<16x32xf32> to vector<16xf32>
      %14 = vector.shape_cast %13 : vector<16xf32> to vector<16x1xf32>
      %cst_12 = arith.constant 3.200000e+01 : f32
      %15 = vector.broadcast %cst_12 : f32 to vector<16x1xf32>
      %16 = arith.divf %14, %15 : vector<16x1xf32>
      %17 = arith.mulf %12, %12 : vector<16x32xf32>
      %cst_13 = arith.constant dense<0.000000e+00> : vector<16xf32>
      %18 = vector.multi_reduction <add>, %17, %cst_13 [1] : vector<16x32xf32> to vector<16xf32>
      %19 = vector.shape_cast %18 : vector<16xf32> to vector<16x1xf32>
      %cst_14 = arith.constant 3.200000e+01 : f32
      %20 = vector.broadcast %cst_14 : f32 to vector<16x1xf32>
      %21 = arith.divf %19, %20 : vector<16x1xf32>
      %22 = arith.mulf %16, %16 : vector<16x1xf32>
      %23 = arith.subf %21, %22 : vector<16x1xf32>
      %cst_15 = arith.constant 0.000000e+00 : f32
      %24 = vector.broadcast %cst_15 : f32 to vector<16x1xf32>
      %25 = arith.maximumf %23, %24 : vector<16x1xf32>
      %26 = vector.broadcast %16 : vector<16x1xf32> to vector<16x32xf32>
      %27 = arith.subf %12, %26 : vector<16x32xf32>
      %cst_16 = arith.constant 9.99999974E-6 : f32
      %28 = vector.broadcast %cst_16 : f32 to vector<16x1xf32>
      %29 = arith.addf %25, %28 : vector<16x1xf32>
      %30 = math.rsqrt %29 : vector<16x1xf32>
      %31 = vector.broadcast %30 : vector<16x1xf32> to vector<16x32xf32>
      %32 = arith.mulf %27, %31 : vector<16x32xf32>
      %c0_17 = arith.constant 0 : index
      %c0_18 = arith.constant 0 : index
      %33 = vector.load %arg3[%c0_17, %c0_18] : memref<1x32xf32, #tpu.memory_space<vmem>>, vector<1x32xf32>
      %34 = vector.broadcast %33 : vector<1x32xf32> to vector<16x32xf32>
      %35 = arith.mulf %32, %34 : vector<16x32xf32>
      %c0_19 = arith.constant 0 : index
      %c0_20 = arith.constant 0 : index
      %36 = vector.load %arg4[%c0_19, %c0_20] : memref<1x32xf32, #tpu.memory_space<vmem>>, vector<1x32xf32>
      %37 = vector.broadcast %36 : vector<1x32xf32> to vector<16x32xf32>
      %38 = arith.addf %35, %37 : vector<16x32xf32>
      %c0_21 = arith.constant 0 : index
      %c0_22 = arith.constant 0 : index
      %39 = vector.load %arg8[%c0_21, %c0_22] : memref<16x32xf32, #tpu.memory_space<vmem>>, vector<16x32xf32>
      tpu.vector_store %arg8[%c0_21, %c0_22], %38 {strides = array<i32>} : memref<16x32xf32, #tpu.memory_space<vmem>>, vector<16x32xf32>,
    } else {
    }
    %c0 = arith.constant 0 : index
    %c0_1 = arith.constant 0 : index
    %3 = vector.load %arg8[%c0, %c0_1] : memref<16x32xf32, #tpu.memory_space<vmem>>, vector<16x32xf32>
    %c0_2 = arith.constant 0 : index
    %c0_3 = arith.constant 0 : index
    %4 = vector.load %arg5[%c0_2, %c0_3] : memref<32x128xf32, #tpu.memory_space<vmem>>, vector<32x128xf32>
    %cst = arith.constant dense<0.000000e+00> : vector<16x128xf32>
    %5 = tpu.matmul %3, %4, %cst {dimension_numbers = #tpu.dot_dimension_numbers<[1], [0], [0], [1], [0, 0, 1, 1], [], []>} : vector<16x32xf32>, vector<32x128xf32>, vector<16x128xf32> -> vector<16x128xf32>
    %c0_4 = arith.constant 0 : index
    %c0_5 = arith.constant 0 : index
    %6 = vector.load %arg6[%c0_4, %c0_5] : memref<1x128xf32, #tpu.memory_space<vmem>>, vector<1x128xf32>
    %7 = vector.broadcast %6 : vector<1x128xf32> to vector<16x128xf32>
    %8 = arith.addf %5, %7 : vector<16x128xf32>
    %cst_6 = arith.constant 0.000000e+00 : f32
    %9 = vector.broadcast %cst_6 : f32 to vector<16x128xf32>
    %10 = arith.maximumf %8, %9 : vector<16x128xf32>
    %c0_7 = arith.constant 0 : index
    %c0_8 = arith.constant 0 : index
    %11 = vector.load %arg7[%c0_7, %c0_8] : memref<16x128xf32, #tpu.memory_space<vmem>>, vector<16x128xf32>
    tpu.vector_store %arg7[%c0_7, %c0_8], %10 {strides = array<i32>} : memref<16x128xf32, #tpu.memory_space<vmem>>, vector<16x128xf32>,
    return
  }
  func.func @transform_0(%arg0: i32, %arg1: i32) -> (i32, i32) {
    %c0_i32 = arith.constant 0 : i32
    %c0_i32_0 = arith.constant 0 : i32
    return %arg0, %c0_i32 : i32, i32
  }
  func.func @transform_1(%arg0: i32, %arg1: i32) -> (i32, i32) {
    %c0_i32 = arith.constant 0 : i32
    %c0_i32_0 = arith.constant 0 : i32
    %c0_i32_1 = arith.constant 0 : i32
    return %c0_i32, %c0_i32_0 : i32, i32
  }
  func.func @transform_2(%arg0: i32, %arg1: i32) -> (i32, i32) {
    %c0_i32 = arith.constant 0 : i32
    %c0_i32_0 = arith.constant 0 : i32
    %c0_i32_1 = arith.constant 0 : i32
    return %c0_i32, %c0_i32_0 : i32, i32
  }
  func.func @transform_3(%arg0: i32, %arg1: i32) -> (i32, i32) {
    %c0_i32 = arith.constant 0 : i32
    %c0_i32_0 = arith.constant 0 : i32
    return %c0_i32, %arg1 : i32, i32
  }
  func.func @transform_4(%arg0: i32, %arg1: i32) -> (i32, i32) {
    %c0_i32 = arith.constant 0 : i32
    %c0_i32_0 = arith.constant 0 : i32
    return %c0_i32, %arg1 : i32, i32
  }
  func.func @transform_5(%arg0: i32, %arg1: i32) -> (i32, i32) {
    %c0_i32 = arith.constant 0 : i32
    return %arg0, %arg1 : i32, i32
  }
}

</mosaic_0001>

<llo_original>
// kernel: tpu_custom_call.1
$region0: #{tpu_custom_call.1}
  #allocation0 [shape = 'u32[]', space=smem, size = 0x4, offset = 0x4, fixed_abs, tag = 'smem constant byte address 0x4 - core index']
  #allocation1 [shape = 'u32[72,128]{1,0:T(1,128)}', space=vmem, size = 0x9000, scoped, tag = 'internal scratch']
  #allocation2 [shape = 'f32[16,32]{1,0:T(8,128)}', space=vmem, size = 0x2000, scoped, tag = 'scratch operand']
  %s0 = inlined_call_operand.hbm [shape: f32[16,32], index: 0, kind: input, shape index: {}]
  %s1 = inlined_call_operand.hbm [shape: f32[1,32], index: 1, kind: input, shape index: {}]
  %s2 = inlined_call_operand.vmem [shape: f32[1,32], index: 2, kind: input, shape index: {}]
  %s3 = inlined_call_operand.hbm [shape: f32[32,32], index: 3, kind: input, shape index: {}]
  %s4 = inlined_call_operand.vmem [shape: f32[1,32], index: 4, kind: input, shape index: {}]
  %s5 = inlined_call_operand.hbm [shape: f32[16,32], index: 5, kind: output, shape index: {}]
  %s6 = sld [smem:[#allocation0]]
  $region46: #{tpu_custom_call.1} parent=0
    _
  %s8 = ssub.s32 1, %s6
  %s9 = scalar_select 0, %s8, %s6
  $region1: #{tpu_custom_call.1} parent=0
    #allocation3 [shape = 'u8[8192]{0}', space=vmem, size = 0x2000, scoped, tag = 'input window, operand 0, single buffered']
    #allocation4 [shape = 's32[1]{0}', space=sflag, size = 0x4, scoped, tag = 'scoped memory for tpu_custom_call.1']
    #allocation5 [shape = 's32[1]{0}', space=sflag, size = 0x4, scoped, tag = 'scoped memory for tpu_custom_call.1']
    #allocation6 [shape = 'u8[512]{0}', space=vmem, size = 0x400, scoped, tag = 'input window, operand 1, single buffered']
    #allocation7 [shape = 's32[1]{0}', space=sflag, size = 0x4, scoped, tag = 'scoped memory for tpu_custom_call.1']
    #allocation8 [shape = 'u8[16384]{0}', space=vmem, size = 0x4000, scoped, tag = 'input window, operand 3, single buffered']
    #allocation9 [shape = 'u8[8192]{0}', space=vmem, size = 0x2000, scoped, tag = 'output window, operand 0, single buffered']
    %10 = vsyncpa [#allocation4], 0
    %11 = vsyncpa [#allocation7], 0
    %12 = vsyncpa [#allocation5], 0
    // Predicated region
    $region2: #{tpu_custom_call.1} parent=1 // pred_check
      _
    $region3: #{tpu_custom_call.1} parent=1 // pred_check_branch
      %14 = sbr.rel (0) target = $region5
    $region4: #{tpu_custom_call.1} parent=1 // pred_region
      %16 = vsyncadd [#allocation4], 0
      %s17 = sshll.u32 %s0, 4
      %s18 = int_to_ptr.hbm [resolvable:$true] %s17
      %s19 = sshll.u32 [#allocation3], 4
      %s20 = int_to_ptr.vmem [resolvable:$true] %s19
      %25 = dma.hbm_to_vmem [thread:$0]  %s18, 256, %s20, [#allocation4], 128, 128, 8
    $region5: #{tpu_custom_call.1} parent=1 // pred_fallthru
      _
    // Predicated region
    $region6: #{tpu_custom_call.1} parent=1 // pred_check
      _
    $region7: #{tpu_custom_call.1} parent=1 // pred_check_branch
      %27 = sbr.rel (0) target = $region9
    $region8: #{tpu_custom_call.1} parent=1 // pred_region
      %29 = vsyncadd [#allocation7], 0
      %s31 = sshll.u32 %s1, 4
      %s32 = int_to_ptr.hbm [resolvable:$true] %s31
      %s33 = sshll.u32 [#allocation6], 4
      %s34 = int_to_ptr.vmem [resolvable:$true] %s33
      %36 = dma.hbm_to_vmem [thread:$0]  %s32, 16, %s34, [#allocation7]
    $region9: #{tpu_custom_call.1} parent=1 // pred_fallthru
      _
    // Predicated region
    $region10: #{tpu_custom_call.1} parent=1 // pred_check
      _
    $region11: #{tpu_custom_call.1} parent=1 // pred_check_branch
      %38 = sbr.rel (0) target = $region13
    $region12: #{tpu_custom_call.1} parent=1 // pred_region
      _
    $region13: #{tpu_custom_call.1} parent=1 // pred_fallthru
      _
    // Predicated region
    $region14: #{tpu_custom_call.1} parent=1 // pred_check
      _
    $region15: #{tpu_custom_call.1} parent=1 // pred_check_branch
      %40 = sbr.rel (0) target = $region17
    $region16: #{tpu_custom_call.1} parent=1 // pred_region
      %42 = vsyncadd [#allocation7], 0
      %s43 = sshll.u32 %s3, 4
      %s44 = int_to_ptr.hbm [resolvable:$true] %s43
      %s45 = sshll.u32 [#allocation8], 4
      %s46 = int_to_ptr.vmem [resolvable:$true] %s45
      %51 = dma.hbm_to_vmem [thread:$0]  %s44, 512, %s46, [#allocation7], 128, 128, 8
    $region17: #{tpu_custom_call.1} parent=1 // pred_fallthru
      _
    // Predicated region
    $region18: #{tpu_custom_call.1} parent=1 // pred_check
      _
    $region19: #{tpu_custom_call.1} parent=1 // pred_check_branch
      %53 = sbr.rel (0) target = $region21
    $region20: #{tpu_custom_call.1} parent=1 // pred_region
      _
    $region21: #{tpu_custom_call.1} parent=1 // pred_fallthru
      _
    // Predicated region
    $region22: #{tpu_custom_call.1} parent=1 // pred_check
      _
    $region23: #{tpu_custom_call.1} parent=1 // pred_check_branch
      %55 = sbr.rel (0) target = $region25
    $region24: #{tpu_custom_call.1} parent=1 // pred_region
      %57 = dma.done [#allocation4], 256
    $region25: #{tpu_custom_call.1} parent=1 // pred_fallthru
      _
    // Predicated region
    $region26: #{tpu_custom_call.1} parent=1 // pred_check
      _
    $region27: #{tpu_custom_call.1} parent=1 // pred_check_branch
      %59 = sbr.rel (0) target = $region29
    $region28: #{tpu_custom_call.1} parent=1 // pred_region
      %61 = dma.done [#allocation7], 16
    $region29: #{tpu_custom_call.1} parent=1 // pred_fallthru
      _
    // Predicated region
    $region30: #{tpu_custom_call.1} parent=1 // pred_check
      _
    $region31: #{tpu_custom_call.1} parent=1 // pred_check_branch
      %63 = sbr.rel (0) target = $region33
    $region32: #{tpu_custom_call.1} parent=1 // pred_region
      %65 = dma.done [#allocation7], 512
    $region33: #{tpu_custom_call.1} parent=1 // pred_fallthru
      _
    %p66 = scmp.eq.s32.totalorder 0, 0
    // Predicated region
    $region34: #{tpu_custom_call.1} parent=1 // pred_check
      %p67 = pneg %p66
    $region35: #{tpu_custom_call.1} parent=1 // pred_check_branch
      %69 = sbr.rel (%p67) target = $region37
    $region36: #{tpu_custom_call.1} parent=1 // pred_region
      %v70 = vld [vmem:[#allocation3] sm:$0xff]
      %v71 = vld [vmem:[#allocation3 + $0x8] sm:$0xff]
      %vm72 = vcmask 261120
      %v73 = vsel %vm72, %v70, 0.0
      %74 = vadd.xlane.f32.xlu0 %v73
      %v75 = vpop.xlane.xlu0 %74
      %v76 = vsel %vm72, %v71, 0.0
      %77 = vadd.xlane.f32.xlu0 %v76
      %v78 = vpop.xlane.xlu0 %77
      %v79 = vrcp.pop 32.0
      %v80 = vmul.f32 32.0, %v79
      %v81 = vsub.f32 1.0, %v80
      %v82 = vmul.f32 %v79, %v81
      %v83 = vadd.f32 %v79, %v82
      %vm84 = vweird.f32 %v79
      %v85 = vsel %vm84, %v79, %v83
      %v86 = vmul.f32 %v75, %v85
      %v87 = vmul.f32 %v78, %v85
      %v88 = vmul.f32 %v70, %v70
      %v89 = vmul.f32 %v71, %v71
      %v90 = vsel %vm72, %v88, 0.0
      %91 = vadd.xlane.f32.xlu0 %v90
      %v92 = vpop.xlane.xlu0 %91
      %v93 = vsel %vm72, %v89, 0.0
      %94 = vadd.xlane.f32.xlu0 %v93
      %v95 = vpop.xlane.xlu0 %94
      %v96 = vmul.f32 %v92, %v85
      %v97 = vmul.f32 %v95, %v85
      %v98 = vmul.f32 %v86, %v86
      %v99 = vmul.f32 %v87, %v87
      %v100 = vsub.f32 %v96, %v98
      %v101 = vsub.f32 %v97, %v99
      %v102 = vmax.f32 %v100, 0.0
      %v103 = vmax.f32 %v101, 0.0
      %v104 = vsub.f32 %v70, %v86
      %v105 = vsub.f32 %v71, %v87
      %v106 = vadd.f32 %v102, 1e-05
      %v107 = vadd.f32 %v103, 1e-05
      %v108 = vrsqrt.pop %v106
      %v109 = vmul.f32 %v108, %v106
      %v110 = vmul.f32 %v109, %v108
      %v111 = vmul.f32 0.5, %v110
      %v112 = vsub.f32 1.5, %v111
      %v113 = vmul.f32 %v108, %v112
      %vm114 = vweird.f32 %v106
      %vm115 = vweird.f32 %v108
      %vm116 = vmor %vm114, %vm115
      %v117 = vsel %vm116, %v108, %v113
      %v118 = vrsqrt.pop %v107
      %v119 = vmul.f32 %v118, %v107
      %v120 = vmul.f32 %v119, %v118
      %v121 = vmul.f32 0.5, %v120
      %v122 = vsub.f32 1.5, %v121
      %v123 = vmul.f32 %v118, %v122
      %vm124 = vweird.f32 %v107
      %vm125 = vweird.f32 %v118
      %vm126 = vmor %vm124, %vm125
      %v127 = vsel %vm126, %v118, %v123
      %v128 = vmul.f32 %v104, %v117
      %v129 = vmul.f32 %v105, %v127
      %v130 = vld [vmem:[#allocation6] sm:$0x1]
      %v132 = vperm.slane %v130, 0
      %v134 = vmul.f32 %v128, %v132
      %v135 = vmul.f32 %v129, %v132
      %v136 = vld [vmem:[%s2] sm:$0x1]
      %v138 = vperm.slane %v136, 0
      %v140 = vadd.f32 %v134, %v138
      %v141 = vadd.f32 %v135, %v138
      %142 = vst.msk [vmem:[#allocation2] sm:$0xff] %vm72, %v140
      %143 = vst.msk [vmem:[#allocation2 + $0x8] sm:$0xff] %vm72, %v141
    $region37: #{tpu_custom_call.1} parent=1 // pred_fallthru
      _
    %v144 = vld [vmem:[#allocation2] sm:$0xff]
    %v145 = vld [vmem:[#allocation2 + $0x8] sm:$0xff]
    %v146 = vld [vmem:[#allocation8] sm:$0xff]
    %v147 = vld [vmem:[#allocation8 + $0x8] sm:$0xff]
    %v148 = vld [vmem:[#allocation8 + $0x10] sm:$0xff]
    %v149 = vld [vmem:[#allocation8 + $0x18] sm:$0xff]
    %v150 = vld [vmem:[%s4] sm:$0x1]
    %v152 = vperm.slane %v150, 0
    %vm154 = vcmask 261120
    %v156 = vsel %vm154, %v144, 0
    %v159 = vsel %vm154, %v145, 0
    %161 = vmatpush.msra.mxu0 0.0
    %162 = vmatpush.msra.mxu0 0.0
    %163 = vmatpush.msra.mxu0 0.0
    %164 = vmatpush.msra.mxu0 0.0
    %165 = vmatpush.msra.mxu0 0.0
    %166 = vmatpush.msra.mxu0 0.0
    %167 = vmatpush.msra.mxu0 0.0
    %168 = vmatpush.msra.mxu0 0.0
    %169 = vmatpush.msra.mxu0 0.0
    %170 = vmatpush.msra.mxu0 0.0
    %171 = vmatpush.msra.mxu0 0.0
    %172 = vmatpush.msra.mxu0 0.0
    %173 = vmatpush.msra.mxu0 %v149
    %174 = vmatpush.msra.mxu0 %v148
    %175 = vmatpush.msra.mxu0 %v147
    %176 = vmatpush.msra.mxu0 %v146
    %177 = vmatmul.f32.gmra.mxu0 %v156
    %v178 = vpop.f32.mrf.mxu0
    %v179 = vadd.f32 %v152, %v178
    %180 = vmatmul.f32.gmra.mxu0 %v159
    %v181 = vpop.f32.mrf.mxu0
    %v182 = vadd.f32 %v152, %v181
    %183 = vdwg.mxu0
    %v184 = vmax.f32 %v179, 0.0
    %v185 = vmax.f32 %v182, 0.0
    %186 = vst [vmem:[#allocation9] sm:$0xff] %v184
    %187 = vst [vmem:[#allocation9 + $0x8] sm:$0xff] %v185
    // Predicated region
    $region38: #{tpu_custom_call.1} parent=1 // pred_check
      _
    $region39: #{tpu_custom_call.1} parent=1 // pred_check_branch
      %189 = sbr.rel (0) target = $region41
    $region40: #{tpu_custom_call.1} parent=1 // pred_region
      %191 = vsyncadd [#allocation5], 0
      %s192 = sshll.u32 [#allocation9], 4
      %s193 = int_to_ptr.vmem [resolvable:$true] %s192
      %s194 = sshll.u32 %s5, 4
      %s195 = int_to_ptr.hbm [resolvable:$true] %s194
      %200 = dma.vmem_to_hbm [thread:$0]  %s193, 256, %s195, [#allocation5], 128, 128, 8
    $region41: #{tpu_custom_call.1} parent=1 // pred_fallthru
      _
    // Predicated region
    $region42: #{tpu_custom_call.1} parent=1 // pred_check
      _
    $region43: #{tpu_custom_call.1} parent=1 // pred_check_branch
      %202 = sbr.rel (0) target = $region45
    $region44: #{tpu_custom_call.1} parent=1 // pred_region
      %204 = dma.done [#allocation5], 256
    $region45: #{tpu_custom_call.1} parent=1 // pred_fallthru
      _
    %205 = vsyncpa [#allocation4], 1
    %206 = vsyncpa [#allocation7], 1
    %207 = vsyncpa [#allocation5], 1

</llo_original>
